<compile_context>
chip_gen: v6e
topology: v6e:2x2x1
jax: 0.10.0
libtpu: 0.0.40
codegen_flags: <defaults>
</compile_context>

<pallas_src>
import math
import jax
import jax.numpy as jnp
from jax.experimental import pallas as pl
from jax.experimental.pallas import tpu as pltpu


def _round_up(n: int, m: int) -> int:
    return ((n + m - 1) // m) * m


def _choose_tile(B: int, tile_b: int, chunk: int):
    """Pick (batch tile rows, inner chunk rows). Prefers >=2 roughly equal tiles for v7x."""
    if B <= chunk:
        tb = _round_up(max(B, 1), 8)        # single small tile, no inner chunking needed
        return tb, tb
    tile_b = max(chunk, _round_up(tile_b, chunk))
    if B <= 2 * tile_b:
        # Split medium batches into >=2 roughly equal, chunk-multiple tiles (v7x has 2 TCs).
        half = _round_up((B + 1) // 2, chunk)
        tb = max(chunk, min(tile_b, half))
    else:
        tb = tile_b
    return tb, chunk


def _make_mlp_kernel(num_layers: int, chunk: int, n_chunks: int):
    """Fused MLP kernel. Per grid step: one batch tile [tb, F]; all weights/biases VMEM-resident.
    Inner loop walks `chunk`-row slabs so f32 intermediates never scale with the DMA tile."""

    def kernel(*refs):
        # refs = (x_ref, w0, b0, w1, b1, ..., o_ref)
        x_ref = refs[0]
        o_ref = refs[-1]
        p_refs = refs[1:-1]

        # Hoist the (tiny) resident weight/bias loads out of the chunk loop.
        ws = [p_refs[2 * li][...] for li in range(num_layers)]       # [in, out] bf16
        bs = [p_refs[2 * li + 1][...] for li in range(num_layers)]   # [1, out]  f32

        def do_chunk(row0):
            h = x_ref[pl.ds(row0, chunk), :].astype(jnp.bfloat16)    # [chunk, F] bf16
            for li in range(num_layers):
                z = jnp.dot(h, ws[li], preferred_element_type=jnp.float32) + bs[li]  # [chunk, out] f32 (MXU)
                if li < num_layers - 1:
                    # ReLU on the f32 accumulator, narrow to bf16 for the next MXU pass.
                    h = jnp.maximum(z, 0.0).astype(jnp.bfloat16)
                else:
                    # Exact sigmoid: exp on EUP + exact divide (memory-bound kernel -> free).
                    o_ref[pl.ds(row0, chunk), :] = 1.0 / (1.0 + jnp.exp(-z))

        if n_chunks == 1:
            do_chunk(0)
        else:
            @pl.loop(0, n_chunks)
            def _(c):
                do_chunk(pl.multiple_of(c * chunk, chunk))

    return kernel


def init_params(key, inputs: int, hidden_layers: int = 1, neurons: int = 64):
    """Deterministic init matching PyTorch nn.Linear default: U(-1/sqrt(fan_in), 1/sqrt(fan_in)).
    Weights kept in PyTorch-native [out, in] layout; biases as [out]."""
    if hidden_layers == 0:
        dims = [(inputs, 1)]
    else:
        dims = [(inputs, neurons)]
        dims += [(neurons, neurons)] * hidden_layers
        dims += [(neurons, 1)]

    params = []
    for (fan_in, fan_out) in dims:
        key, kw, kb = jax.random.split(key, 3)
        bound = 1.0 / math.sqrt(fan_in)
        w = jax.random.uniform(kw, (fan_out, fan_in), jnp.float32, -bound, bound)  # [out, in]
        b = jax.random.uniform(kb, (fan_out,), jnp.float32, -bound, bound)         # [out]
        params.append((w, b))
    return params


def mlp_forward(x, params, *, tile_b: int = 8192, chunk: int = 512):
    """Batch-tiled fused MLP Pallas kernel. x: [B, inputs] (f32 or bf16) -> [B, 1] f32.
    tile_b is the main sweep knob (8K-32K rows); chunk bounds the in-kernel working set."""
    B, F = x.shape
    num_layers = len(params)

    tb, ck = _choose_tile(B, tile_b, chunk)
    grid_b = pl.cdiv(B, tb)

    flat = []
    in_specs = [pl.BlockSpec((tb, F), lambda i: (i, 0))]              # streamed batch tile
    param_bytes = 0
    for (w, b) in params:
        out_dim, in_dim = w.shape
        flat.append(w.T.astype(jnp.bfloat16))                         # [in, out] bf16
        flat.append(b.reshape(1, out_dim).astype(jnp.float32))        # [1, out]  f32
        in_specs.append(pl.BlockSpec((in_dim, out_dim), lambda i: (0, 0)))   # constant -> resident
        in_specs.append(pl.BlockSpec((1, out_dim), lambda i: (0, 0)))
        param_bytes += in_dim * out_dim * 2 + out_dim * 4

    # Advisory cost estimate so XLA schedules/overlaps surrounding ops sensibly.
    flops = 2 * B * sum(w.shape[0] * w.shape[1] for (w, _) in params)
    bytes_accessed = B * (F * x.dtype.itemsize + 4) + param_bytes
    cost = pl.CostEstimate(flops=flops, transcendentals=B, bytes_accessed=bytes_accessed)

    # VMEM budget: double-buffered x/out tiles + resident params + chunk-sized intermediates.
    need = (2 * tb * F * x.dtype.itemsize) + (2 * tb * 4) + 4 * param_bytes + (2 << 20)
    vmem_limit = int(min(48 << 20, max(32 << 20, 2 * need)))          # v5e default is only 16 MiB; cap for v7x

    out = pl.pallas_call(
        _make_mlp_kernel(num_layers, ck, tb // ck),
        out_shape=jax.ShapeDtypeStruct((B, 1), jnp.float32),
        grid=(grid_b,),
        in_specs=in_specs,
        out_specs=pl.BlockSpec((tb, 1), lambda i: (i, 0)),
        compiler_params=pltpu.CompilerParams(
            dimension_semantics=("parallel",),                        # v7x: shard batch tiles over 2 TCs
            vmem_limit_bytes=vmem_limit,
        ),
        cost_estimate=cost,
    )(x, *flat)

    return out


def mlp_reference(x, params):
    """Pure-JAX f32 reference for correctness checking."""
    h = x
    for i, (w, b) in enumerate(params):
        z = h @ w.T + b.reshape(1, -1)
        if i < len(params) - 1:
            h = jnp.maximum(z, 0.0)
        else:
            h = jax.nn.sigmoid(z)
    return h


if __name__ == "__main__":
    key = jax.random.PRNGKey(0)
    k_params, k_x1, k_x2 = jax.random.split(key, 3)

    INPUTS = 32        # feature dim
    HIDDEN_LAYERS = 1  # PyTorch default
    NEURONS = 64       # PyTorch default

    params = init_params(k_params, INPUTS, HIDDEN_LAYERS, NEURONS)

    # Small shape: single small tile, no inner chunking. bf16 weights => loosened tolerance.
    x_small = jax.random.normal(k_x1, (8, INPUTS), jnp.float32)
    out_small = jax.block_until_ready(mlp_forward(x_small, params))
    ref_small = mlp_reference(x_small, params)
    assert out_small.shape == (8, 1)
    assert jnp.allclose(out_small, ref_small, atol=2e-2, rtol=2e-2), "mismatch (small batch)"

    # Non-multiple batch exercising the >=2-tile split, partial last tile, and the inner chunk loop.
    x_big = jax.random.normal(k_x2, (1061, INPUTS), jnp.float32)
    out_big = jax.block_until_ready(mlp_forward(x_big, params))
    ref_big = mlp_reference(x_big, params)
    assert out_big.shape == (1061, 1)
    assert jnp.allclose(out_big, ref_big, atol=2e-2, rtol=2e-2), "mismatch (large batch)"

    print("KERNEL_OK")
</pallas_src>

<mosaic_0001>
module attributes {stable_mosaic.version = 11 : i64} {
  func.func @kernel(%arg0: i32, %arg1: memref<8x32xf32, #tpu.memory_space<vmem>>, %arg2: memref<32x64xbf16, #tpu.memory_space<vmem>>, %arg3: memref<1x64xf32, #tpu.memory_space<vmem>>, %arg4: memref<64x64xbf16, #tpu.memory_space<vmem>>, %arg5: memref<1x64xf32, #tpu.memory_space<vmem>>, %arg6: memref<64x1xbf16, #tpu.memory_space<vmem>>, %arg7: memref<1x1xf32, #tpu.memory_space<vmem>>, %arg8: memref<8x1xf32, #tpu.memory_space<vmem>>) attributes {dimension_semantics = [#tpu.dimension_semantics<parallel>], iteration_bounds = array<i64: 1>, scalar_prefetch = 0 : i64, scratch_operands = 0 : i64, tpu.core_type = #tpu.core_type<tc>, window_params = [{transform_indices = @transform_0, window_bounds = array<i64: 8, 32>}, {pipeline_mode = #tpu.pipeline_mode<synchronous>, transform_indices = @transform_1, window_bounds = array<i64: 32, 64>}, {pipeline_mode = #tpu.pipeline_mode<synchronous>, transform_indices = @transform_2, window_bounds = array<i64: 1, 64>}, {pipeline_mode = #tpu.pipeline_mode<synchronous>, transform_indices = @transform_3, window_bounds = array<i64: 64, 64>}, {pipeline_mode = #tpu.pipeline_mode<synchronous>, transform_indices = @transform_4, window_bounds = array<i64: 1, 64>}, {pipeline_mode = #tpu.pipeline_mode<synchronous>, transform_indices = @transform_5, window_bounds = array<i64: 64, 1>}, {pipeline_mode = #tpu.pipeline_mode<synchronous>, transform_indices = @transform_6, window_bounds = array<i64: 1, 1>}, {transform_indices = @transform_7, window_bounds = array<i64: 8, 1>}]} {
    %c0 = arith.constant 0 : index
    %c0_0 = arith.constant 0 : index
    %0 = vector.load %arg2[%c0, %c0_0] : memref<32x64xbf16, #tpu.memory_space<vmem>>, vector<32x64xbf16>
    %c0_1 = arith.constant 0 : index
    %c0_2 = arith.constant 0 : index
    %1 = vector.load %arg4[%c0_1, %c0_2] : memref<64x64xbf16, #tpu.memory_space<vmem>>, vector<64x64xbf16>
    %c0_3 = arith.constant 0 : index
    %c0_4 = arith.constant 0 : index
    %2 = vector.load %arg6[%c0_3, %c0_4] : memref<64x1xbf16, #tpu.memory_space<vmem>>, vector<64x1xbf16>
    %c0_5 = arith.constant 0 : index
    %c0_6 = arith.constant 0 : index
    %3 = vector.load %arg3[%c0_5, %c0_6] : memref<1x64xf32, #tpu.memory_space<vmem>>, vector<1x64xf32>
    %c0_7 = arith.constant 0 : index
    %c0_8 = arith.constant 0 : index
    %4 = vector.load %arg5[%c0_7, %c0_8] : memref<1x64xf32, #tpu.memory_space<vmem>>, vector<1x64xf32>
    %c0_9 = arith.constant 0 : index
    %c0_10 = arith.constant 0 : index
    %5 = vector.load %arg7[%c0_9, %c0_10] : memref<1x1xf32, #tpu.memory_space<vmem>>, vector<1x1xf32>
    %c0_11 = arith.constant 0 : index
    %c0_12 = arith.constant 0 : index
    %6 = vector.load %arg1[%c0_11, %c0_12] : memref<8x32xf32, #tpu.memory_space<vmem>>, vector<8x32xf32>
    %7 = arith.truncf %6 : vector<8x32xf32> to vector<8x32xbf16>
    %cst = arith.constant dense<0.000000e+00> : vector<8x64xf32>
    %8 = tpu.matmul %7, %0, %cst {dimension_numbers = #tpu.dot_dimension_numbers<[1], [0], [0], [1], [0, 0, 1, 1], [], []>} : vector<8x32xbf16>, vector<32x64xbf16>, vector<8x64xf32> -> vector<8x64xf32>
    %9 = vector.broadcast %3 : vector<1x64xf32> to vector<8x64xf32>
    %10 = arith.addf %8, %9 : vector<8x64xf32>
    %cst_13 = arith.constant 0.000000e+00 : f32
    %11 = vector.broadcast %cst_13 : f32 to vector<8x64xf32>
    %12 = arith.maximumf %10, %11 : vector<8x64xf32>
    %13 = arith.truncf %12 : vector<8x64xf32> to vector<8x64xbf16>
    %cst_14 = arith.constant dense<0.000000e+00> : vector<8x64xf32>
    %14 = tpu.matmul %13, %1, %cst_14 {dimension_numbers = #tpu.dot_dimension_numbers<[1], [0], [0], [1], [0, 0, 1, 1], [], []>} : vector<8x64xbf16>, vector<64x64xbf16>, vector<8x64xf32> -> vector<8x64xf32>
    %15 = vector.broadcast %4 : vector<1x64xf32> to vector<8x64xf32>
    %16 = arith.addf %14, %15 : vector<8x64xf32>
    %cst_15 = arith.constant 0.000000e+00 : f32
    %17 = vector.broadcast %cst_15 : f32 to vector<8x64xf32>
    %18 = arith.maximumf %16, %17 : vector<8x64xf32>
    %19 = arith.truncf %18 : vector<8x64xf32> to vector<8x64xbf16>
    %cst_16 = arith.constant dense<0.000000e+00> : vector<8x1xf32>
    %20 = tpu.matmul %19, %2, %cst_16 {dimension_numbers = #tpu.dot_dimension_numbers<[1], [0], [0], [1], [0, 0, 1, 1], [], []>} : vector<8x64xbf16>, vector<64x1xbf16>, vector<8x1xf32> -> vector<8x1xf32>
    %21 = vector.broadcast %5 : vector<1x1xf32> to vector<8x1xf32>
    %22 = arith.addf %20, %21 : vector<8x1xf32>
    %cst_17 = arith.constant 0.000000e+00 : f32
    %23 = vector.broadcast %cst_17 : f32 to vector<8x1xf32>
    %24 = arith.subf %23, %22 : vector<8x1xf32>
    %25 = math.exp %24 : vector<8x1xf32>
    %cst_18 = arith.constant 1.000000e+00 : f32
    %26 = vector.broadcast %cst_18 : f32 to vector<8x1xf32>
    %27 = arith.addf %26, %25 : vector<8x1xf32>
    %cst_19 = arith.constant 1.000000e+00 : f32
    %28 = vector.broadcast %cst_19 : f32 to vector<8x1xf32>
    %29 = arith.divf %28, %27 : vector<8x1xf32>
    %c0_20 = arith.constant 0 : index
    %c0_21 = arith.constant 0 : index
    %30 = vector.load %arg8[%c0_20, %c0_21] : memref<8x1xf32, #tpu.memory_space<vmem>>, vector<8x1xf32>
    tpu.vector_store %arg8[%c0_20, %c0_21], %29 {strides = array<i32>} : memref<8x1xf32, #tpu.memory_space<vmem>>, vector<8x1xf32>,
    return
  }
  func.func @transform_0(%arg0: i32) -> (i32, i32) {
    %c0_i32 = arith.constant 0 : i32
    %c0_i32_0 = arith.constant 0 : i32
    return %arg0, %c0_i32 : i32, i32
  }
  func.func @transform_1(%arg0: i32) -> (i32, i32) {
    %c0_i32 = arith.constant 0 : i32
    %c0_i32_0 = arith.constant 0 : i32
    %c0_i32_1 = arith.constant 0 : i32
    return %c0_i32, %c0_i32_0 : i32, i32
  }
  func.func @transform_2(%arg0: i32) -> (i32, i32) {
    %c0_i32 = arith.constant 0 : i32
    %c0_i32_0 = arith.constant 0 : i32
    %c0_i32_1 = arith.constant 0 : i32
    return %c0_i32, %c0_i32_0 : i32, i32
  }
  func.func @transform_3(%arg0: i32) -> (i32, i32) {
    %c0_i32 = arith.constant 0 : i32
    %c0_i32_0 = arith.constant 0 : i32
    %c0_i32_1 = arith.constant 0 : i32
    return %c0_i32, %c0_i32_0 : i32, i32
  }
  func.func @transform_4(%arg0: i32) -> (i32, i32) {
    %c0_i32 = arith.constant 0 : i32
    %c0_i32_0 = arith.constant 0 : i32
    %c0_i32_1 = arith.constant 0 : i32
    return %c0_i32, %c0_i32_0 : i32, i32
  }
  func.func @transform_5(%arg0: i32) -> (i32, i32) {
    %c0_i32 = arith.constant 0 : i32
    %c0_i32_0 = arith.constant 0 : i32
    %c0_i32_1 = arith.constant 0 : i32
    return %c0_i32, %c0_i32_0 : i32, i32
  }
  func.func @transform_6(%arg0: i32) -> (i32, i32) {
    %c0_i32 = arith.constant 0 : i32
    %c0_i32_0 = arith.constant 0 : i32
    %c0_i32_1 = arith.constant 0 : i32
    return %c0_i32, %c0_i32_0 : i32, i32
  }
  func.func @transform_7(%arg0: i32) -> (i32, i32) {
    %c0_i32 = arith.constant 0 : i32
    %c0_i32_0 = arith.constant 0 : i32
    return %arg0, %c0_i32 : i32, i32
  }
}

</mosaic_0001>

<llo_original>
// kernel: tpu_custom_call.1
$region0: #{tpu_custom_call.1}
  #allocation0 [shape = 'u32[]', space=smem, size = 0x4, offset = 0x4, fixed_abs, tag = 'smem constant byte address 0x4 - core index']
  #allocation1 [shape = 'u32[144,128]{1,0:T(1,128)}', space=vmem, size = 0x12000, scoped, tag = 'internal scratch']
  #allocation2 [shape = 'f32[1,1]{1,0:T(1,128)S(1)}', space=vmem, size = 0x200, scoped, tag = 'scoped memory for tpu_custom_call.1']
  %s0 = inlined_call_operand.vmem [shape: f32[8,32], index: 0, kind: input, shape index: {}]
  %s1 = inlined_call_operand.hbm [shape: bf16[32,64], index: 1, kind: input, shape index: {}]
  %s2 = inlined_call_operand.hbm [shape: f32[1,64], index: 2, kind: input, shape index: {}]
  %s3 = inlined_call_operand.vmem [shape: bf16[64,64], index: 3, kind: input, shape index: {}]
  %s4 = inlined_call_operand.vmem [shape: f32[1,64], index: 4, kind: input, shape index: {}]
  %s5 = inlined_call_operand.vmem [shape: bf16[64,1], index: 5, kind: input, shape index: {}]
  %s6 = inlined_call_operand.<no memory space> [shape: f32[1,1], index: 6, kind: input, shape index: {}]
  %s7 = inlined_call_operand.vmem [shape: f32[8,1], index: 7, kind: output, shape index: {}]
  %s8 = sld [smem:[#allocation0]]
  $region46: #{tpu_custom_call.1} parent=0
    _
  %s10 = ssub.s32 1, %s8
  %s11 = scalar_select 0, %s10, %s8
  %v12 = vstv %s6
  %13 = vst [vmem:[#allocation2] sm:$0x1] %v12
  $region1: #{tpu_custom_call.1} parent=0
    #allocation3 [shape = 'u8[8192]{0}', space=vmem, size = 0x2000, scoped, tag = 'input window, operand 1, single buffered']
    #allocation4 [shape = 's32[1]{0}', space=sflag, size = 0x4, scoped, tag = 'scoped memory for tpu_custom_call.1']
    #allocation5 [shape = 'u8[512]{0}', space=vmem, size = 0x400, scoped, tag = 'input window, operand 2, single buffered']
    #allocation6 [shape = 's32[1]{0}', space=sflag, size = 0x4, scoped, tag = 'scoped memory for tpu_custom_call.1']
    %14 = vsyncpa [#allocation4], 0
    %15 = vsyncpa [#allocation6], 0
    // Predicated region
    $region2: #{tpu_custom_call.1} parent=1 // pred_check
      _
    $region3: #{tpu_custom_call.1} parent=1 // pred_check_branch
      %17 = sbr.rel (0) target = $region5
    $region4: #{tpu_custom_call.1} parent=1 // pred_region
      _
    $region5: #{tpu_custom_call.1} parent=1 // pred_fallthru
      _
    // Predicated region
    $region6: #{tpu_custom_call.1} parent=1 // pred_check
      _
    $region7: #{tpu_custom_call.1} parent=1 // pred_check_branch
      %19 = sbr.rel (0) target = $region9
    $region8: #{tpu_custom_call.1} parent=1 // pred_region
      %s21 = ssub.s32 256, 256
      %22 = vsyncadd [#allocation4], %s21
      %s23 = sshll.u32 [#allocation3], 4
      %s24 = int_to_ptr.vmem [resolvable:$true] %s23
      %29 = dma.hbm_to_vmem [thread:$0]  %s1, 256, %s24, [#allocation4], 64, 64, 4
    $region9: #{tpu_custom_call.1} parent=1 // pred_fallthru
      _
    // Predicated region
    $region10: #{tpu_custom_call.1} parent=1 // pred_check
      _
    $region11: #{tpu_custom_call.1} parent=1 // pred_check_branch
      %31 = sbr.rel (0) target = $region13
    $region12: #{tpu_custom_call.1} parent=1 // pred_region
      %s33 = ssub.s32 16, 16
      %34 = vsyncadd [#allocation6], %s33
      %s36 = sshll.u32 [#allocation5], 4
      %s37 = int_to_ptr.vmem [resolvable:$true] %s36
      %39 = dma.hbm_to_vmem [thread:$0]  %s2, 16, %s37, [#allocation6]
    $region13: #{tpu_custom_call.1} parent=1 // pred_fallthru
      _
    // Predicated region
    $region14: #{tpu_custom_call.1} parent=1 // pred_check
      _
    $region15: #{tpu_custom_call.1} parent=1 // pred_check_branch
      %41 = sbr.rel (0) target = $region17
    $region16: #{tpu_custom_call.1} parent=1 // pred_region
      _
    $region17: #{tpu_custom_call.1} parent=1 // pred_fallthru
      _
    // Predicated region
    $region18: #{tpu_custom_call.1} parent=1 // pred_check
      _
    $region19: #{tpu_custom_call.1} parent=1 // pred_check_branch
      %43 = sbr.rel (0) target = $region21
    $region20: #{tpu_custom_call.1} parent=1 // pred_region
      _
    $region21: #{tpu_custom_call.1} parent=1 // pred_fallthru
      _
    // Predicated region
    $region22: #{tpu_custom_call.1} parent=1 // pred_check
      _
    $region23: #{tpu_custom_call.1} parent=1 // pred_check_branch
      %45 = sbr.rel (0) target = $region25
    $region24: #{tpu_custom_call.1} parent=1 // pred_region
      _
    $region25: #{tpu_custom_call.1} parent=1 // pred_fallthru
      _
    // Predicated region
    $region26: #{tpu_custom_call.1} parent=1 // pred_check
      _
    $region27: #{tpu_custom_call.1} parent=1 // pred_check_branch
      %47 = sbr.rel (0) target = $region29
    $region28: #{tpu_custom_call.1} parent=1 // pred_region
      _
    $region29: #{tpu_custom_call.1} parent=1 // pred_fallthru
      _
    // Predicated region
    $region30: #{tpu_custom_call.1} parent=1 // pred_check
      _
    $region31: #{tpu_custom_call.1} parent=1 // pred_check_branch
      %49 = sbr.rel (0) target = $region33
    $region32: #{tpu_custom_call.1} parent=1 // pred_region
      %50 = dma.done [#allocation4], 256
    $region33: #{tpu_custom_call.1} parent=1 // pred_fallthru
      _
    // Predicated region
    $region34: #{tpu_custom_call.1} parent=1 // pred_check
      _
    $region35: #{tpu_custom_call.1} parent=1 // pred_check_branch
      %52 = sbr.rel (0) target = $region37
    $region36: #{tpu_custom_call.1} parent=1 // pred_region
      %53 = dma.done [#allocation6], 16
    $region37: #{tpu_custom_call.1} parent=1 // pred_fallthru
      _
    %v55 = vld [vmem:[#allocation3] sm:$0xf]
    %v56 = vld [vmem:[#allocation3 + $0x4] sm:$0xf]
    %v57 = vld [vmem:[#allocation3 + $0x8] sm:$0xf]
    %v58 = vld [vmem:[#allocation3 + $0xc] sm:$0xf]
    %v59 = vld [vmem:[%s3] sm:$0xf]
    %v60 = vld [vmem:[%s3 + $0x4] sm:$0xf]
    %v61 = vld [vmem:[%s3 + $0x8] sm:$0xf]
    %v62 = vld [vmem:[%s3 + $0xc] sm:$0xf]
    %v63 = vld [vmem:[%s3 + $0x10] sm:$0xf]
    %v64 = vld [vmem:[%s3 + $0x14] sm:$0xf]
    %v65 = vld [vmem:[%s3 + $0x18] sm:$0xf]
    %v66 = vld [vmem:[%s3 + $0x1c] sm:$0xf]
    %v67 = vld [vmem:[%s5] sm:$0xf]
    %v68 = vld [vmem:[%s5 + $0x4] sm:$0xf]
    %v69 = vld [vmem:[%s5 + $0x8] sm:$0xf]
    %v70 = vld [vmem:[%s5 + $0xc] sm:$0xf]
    %v71 = vld [vmem:[%s5 + $0x10] sm:$0xf]
    %v72 = vld [vmem:[%s5 + $0x14] sm:$0xf]
    %v73 = vld [vmem:[%s5 + $0x18] sm:$0xf]
    %v74 = vld [vmem:[%s5 + $0x1c] sm:$0xf]
    %v75 = vld [vmem:[#allocation5] sm:$0x1]
    %v76 = vld [vmem:[%s4] sm:$0x1]
    %v77 = vld [vmem:[#allocation2] sm:$0x1]
    %v78 = vld [vmem:[%s0] sm:$0xff]
    %v79 = vpack.c.bf16 %v78, %v78
    %v81 = vlaneseq
    %v82 = vshrl.u32 %v81, 7
    %v83 = vsub.s32 0, %v82
    %v84 = vrot.slane %v75, %v83
    %v90 = vunpack.c.l.b16 %v55
    %v91 = vunpack.c.l.b16 %v56
    %v92 = vunpack.c.l.b16 %v57
    %v93 = vunpack.c.l.b16 %v58
    %v94 = vpack.c.b16 %v91, %v90
    %v95 = vpack.c.b16 %v93, %v92
    %vm98 = vcmask 261120
    %v100 = vsel %vm98, %v79, 0
    %102 = vmatprep.subr.bf16.mxu0 0
    %103 = vmatpush1.bf16.msra.mxu0 0
    %104 = vmatprep.subr.bf16.mxu0 0
    %105 = vmatpush1.bf16.msra.mxu0 0
    %106 = vmatprep.subr.bf16.mxu0 0
    %107 = vmatpush1.bf16.msra.mxu0 0
    %108 = vmatprep.subr.bf16.mxu0 0
    %109 = vmatpush1.bf16.msra.mxu0 0
    %110 = vmatprep.subr.bf16.mxu0 0
    %111 = vmatpush1.bf16.msra.mxu0 0
    %112 = vmatprep.subr.bf16.mxu0 0
    %113 = vmatpush1.bf16.msra.mxu0 0
    %114 = vmatprep.subr.bf16.mxu0 0
    %115 = vmatpush1.bf16.msra.mxu0 %v95
    %116 = vmatprep.subr.bf16.mxu0 0
    %117 = vmatpush1.bf16.msra.mxu0 %v94
    %118 = vmatprep.subr.bf16.mxu0 0
    %119 = vmatpush2.bf16.msra.mxu0 0
    %120 = vmatprep.subr.bf16.mxu0 0
    %121 = vmatpush2.bf16.msra.mxu0 0
    %122 = vmatprep.subr.bf16.mxu0 0
    %123 = vmatpush2.bf16.msra.mxu0 0
    %124 = vmatprep.subr.bf16.mxu0 0
    %125 = vmatpush2.bf16.msra.mxu0 0
    %126 = vmatprep.subr.bf16.mxu0 0
    %127 = vmatpush2.bf16.msra.mxu0 0
    %128 = vmatprep.subr.bf16.mxu0 0
    %129 = vmatpush2.bf16.msra.mxu0 0
    %130 = vmatprep.subr.bf16.mxu0 0
    %131 = vmatpush2.bf16.msra.mxu0 0
    %132 = vmatprep.subr.bf16.mxu0 0
    %133 = vmatpush2.bf16.msra.mxu0 0
    %134 = vmatprep.mubr.bf16.mxu0 0
    %135 = vmatmul.mubr.bf16.gmra.mxu0 %v100
    %v136 = vpop.f32.mrf.mxu0
    %v137 = vadd.f32 %v84, %v136
    %v138 = vpop.f32.mrf.mxu0
    %v139 = vpop.f32.mrf.mxu0
    %v140 = vpop.f32.mrf.mxu0
    %141 = vdwg.mxu0
    %v142 = vmax.f32 %v137, 0.0
    %v143 = vpack.c.bf16 %v142, %v142
    %v145 = vlaneseq
    %v146 = vshrl.u32 %v145, 7
    %v147 = vsub.s32 0, %v146
    %v148 = vrot.slane %v76, %v147
    %v158 = vunpack.c.l.b16 %v59
    %v159 = vunpack.c.l.b16 %v60
    %v160 = vunpack.c.l.b16 %v61
    %v161 = vunpack.c.l.b16 %v62
    %v162 = vunpack.c.l.b16 %v63
    %v163 = vunpack.c.l.b16 %v64
    %v164 = vunpack.c.l.b16 %v65
    %v165 = vunpack.c.l.b16 %v66
    %v166 = vpack.c.b16 %v159, %v158
    %v167 = vpack.c.b16 %v161, %v160
    %v168 = vpack.c.b16 %v163, %v162
    %v169 = vpack.c.b16 %v165, %v164
    %vm174 = vcmask 523264
    %v176 = vsel %vm174, %v143, 0
    %178 = vmatprep.subr.bf16.mxu0 0
    %179 = vmatpush1.bf16.msra.mxu0 0
    %180 = vmatprep.subr.bf16.mxu0 0
    %181 = vmatpush1.bf16.msra.mxu0 0
    %182 = vmatprep.subr.bf16.mxu0 0
    %183 = vmatpush1.bf16.msra.mxu0 0
    %184 = vmatprep.subr.bf16.mxu0 0
    %185 = vmatpush1.bf16.msra.mxu0 0
    %186 = vmatprep.subr.bf16.mxu0 0
    %187 = vmatpush1.bf16.msra.mxu0 %v169
    %188 = vmatprep.subr.bf16.mxu0 0
    %189 = vmatpush1.bf16.msra.mxu0 %v168
    %190 = vmatprep.subr.bf16.mxu0 0
    %191 = vmatpush1.bf16.msra.mxu0 %v167
    %192 = vmatprep.subr.bf16.mxu0 0
    %193 = vmatpush1.bf16.msra.mxu0 %v166
    %194 = vmatprep.subr.bf16.mxu0 0
    %195 = vmatpush2.bf16.msra.mxu0 0
    %196 = vmatprep.subr.bf16.mxu0 0
    %197 = vmatpush2.bf16.msra.mxu0 0
    %198 = vmatprep.subr.bf16.mxu0 0
    %199 = vmatpush2.bf16.msra.mxu0 0
    %200 = vmatprep.subr.bf16.mxu0 0
    %201 = vmatpush2.bf16.msra.mxu0 0
    %202 = vmatprep.subr.bf16.mxu0 0
    %203 = vmatpush2.bf16.msra.mxu0 0
    %204 = vmatprep.subr.bf16.mxu0 0
    %205 = vmatpush2.bf16.msra.mxu0 0
    %206 = vmatprep.subr.bf16.mxu0 0
    %207 = vmatpush2.bf16.msra.mxu0 0
    %208 = vmatprep.subr.bf16.mxu0 0
    %209 = vmatpush2.bf16.msra.mxu0 0
    %210 = vmatprep.mubr.bf16.mxu0 0
    %211 = vmatmul.mubr.bf16.gmra.mxu0 %v176
    %v212 = vpop.f32.mrf.mxu0
    %v213 = vadd.f32 %v148, %v212
    %v214 = vpop.f32.mrf.mxu0
    %v215 = vpop.f32.mrf.mxu0
    %v216 = vpop.f32.mrf.mxu0
    %217 = vdwg.mxu0
    %v218 = vmax.f32 %v213, 0.0
    %v219 = vpack.c.bf16 %v218, %v218
    %v221 = vlaneseq
    %v222 = vshrl.u32 %v221, 7
    %v223 = vsub.s32 0, %v222
    %v224 = vrot.slane %v77, %v223
    %v234 = vunpack.c.l.b16 %v67
    %v235 = vunpack.c.l.b16 %v68
    %v236 = vunpack.c.l.b16 %v69
    %v237 = vunpack.c.l.b16 %v70
    %v238 = vunpack.c.l.b16 %v71
    %v239 = vunpack.c.l.b16 %v72
    %v240 = vunpack.c.l.b16 %v73
    %v241 = vunpack.c.l.b16 %v74
    %v242 = vpack.c.b16 %v235, %v234
    %v243 = vpack.c.b16 %v237, %v236
    %v244 = vpack.c.b16 %v239, %v238
    %v245 = vpack.c.b16 %v241, %v240
    %v251 = vsel %vm174, %v219, 0
    %253 = vmatprep.subr.bf16.mxu0 0
    %254 = vmatpush1.bf16.msra.mxu0 0
    %255 = vmatprep.subr.bf16.mxu0 0
    %256 = vmatpush1.bf16.msra.mxu0 0
    %257 = vmatprep.subr.bf16.mxu0 0
    %258 = vmatpush1.bf16.msra.mxu0 0
    %259 = vmatprep.subr.bf16.mxu0 0
    %260 = vmatpush1.bf16.msra.mxu0 0
    %261 = vmatprep.subr.bf16.mxu0 0
    %262 = vmatpush1.bf16.msra.mxu0 %v245
    %263 = vmatprep.subr.bf16.mxu0 0
    %264 = vmatpush1.bf16.msra.mxu0 %v244
    %265 = vmatprep.subr.bf16.mxu0 0
    %266 = vmatpush1.bf16.msra.mxu0 %v243
    %267 = vmatprep.subr.bf16.mxu0 0
    %268 = vmatpush1.bf16.msra.mxu0 %v242
    %269 = vmatprep.subr.bf16.mxu0 0
    %270 = vmatpush2.bf16.msra.mxu0 0
    %271 = vmatprep.subr.bf16.mxu0 0
    %272 = vmatpush2.bf16.msra.mxu0 0
    %273 = vmatprep.subr.bf16.mxu0 0
    %274 = vmatpush2.bf16.msra.mxu0 0
    %275 = vmatprep.subr.bf16.mxu0 0
    %276 = vmatpush2.bf16.msra.mxu0 0
    %277 = vmatprep.subr.bf16.mxu0 0
    %278 = vmatpush2.bf16.msra.mxu0 0
    %279 = vmatprep.subr.bf16.mxu0 0
    %280 = vmatpush2.bf16.msra.mxu0 0
    %281 = vmatprep.subr.bf16.mxu0 0
    %282 = vmatpush2.bf16.msra.mxu0 0
    %283 = vmatprep.subr.bf16.mxu0 0
    %284 = vmatpush2.bf16.msra.mxu0 0
    %285 = vmatprep.mubr.bf16.mxu0 0
    %286 = vmatmul.mubr.bf16.gmra.mxu0 %v251
    %v287 = vpop.f32.mrf.mxu0
    %v288 = vadd.f32 %v224, %v287
    %v289 = vpop.f32.mrf.mxu0
    %v290 = vpop.f32.mrf.mxu0
    %v291 = vpop.f32.mrf.mxu0
    %292 = vdwg.mxu0
    %v293 = vsub.f32 0.0, %v288
    %v294 = vmul.f32 %v293, 1.442695
    %v295 = vpow.pop %v294
    %v296 = vadd.f32 %v295, 1.0
    %v297 = vrcp.pop %v296
    %v298 = vmul.f32 1.0, %v297
    %vm299 = vcmask 7168
    %300 = vst.msk [vmem:[%s7] sm:$0xff] %vm299, %v298
    // Predicated region
    $region38: #{tpu_custom_call.1} parent=1 // pred_check
      _
    $region39: #{tpu_custom_call.1} parent=1 // pred_check_branch
      %302 = sbr.rel (0) target = $region41
    $region40: #{tpu_custom_call.1} parent=1 // pred_region
      _
    $region41: #{tpu_custom_call.1} parent=1 // pred_fallthru
      _
    // Predicated region
    $region42: #{tpu_custom_call.1} parent=1 // pred_check
      _
    $region43: #{tpu_custom_call.1} parent=1 // pred_check_branch
      %304 = sbr.rel (0) target = $region45
    $region44: #{tpu_custom_call.1} parent=1 // pred_region
      _
    $region45: #{tpu_custom_call.1} parent=1 // pred_fallthru
      _
    %305 = vsyncpa [#allocation4], 1
    %306 = vsyncpa [#allocation6], 1

</llo_original>
